<compile_context>
chip_gen: v7x
topology: tpu7x:2x2x1
jax: 0.10.0
libtpu: 0.0.40
codegen_flags: <defaults>
</compile_context>

<pallas_src>
import numpy as np
import jax
import jax.numpy as jnp
from jax.experimental import pallas as pl
from jax.experimental.pallas import tpu as pltpu

V_JOINTS = 25
N_PARTS = 10
N_BODY = 5

# Part groups, in the output ordering produced by Down_Joint2Part's concat:
# [left_leg_up, left_leg_down, right_leg_up, right_leg_down, torso, head,
#  left_arm_up, left_arm_down, right_arm_up, right_arm_down]
_PART_GROUPS = [
    [16, 17],            # left_leg_up
    [18, 19],            # left_leg_down
    [12, 13],            # right_leg_up
    [14, 15],            # right_leg_down
    [0, 1, 20],          # torso
    [2, 3],              # head
    [8, 9],              # left_arm_up
    [10, 11, 23, 24],    # left_arm_down
    [4, 5],              # right_arm_up
    [6, 7, 21, 22],      # right_arm_down
]

# Body groups over the 10 parts, in Down_Part2Body's concat ordering:
# [left_leg, right_leg, torso(+head), left_arm, right_arm]
_BODY_GROUPS = [[0, 1], [2, 3], [4, 5], [6, 7], [8, 9]]


def make_joint2part():
    """Down_Joint2Part == right-multiply by D (25 x 10), avg-pool per part."""
    d = np.zeros((V_JOINTS, N_PARTS), np.float32)
    for p, g in enumerate(_PART_GROUPS):
        d[g, p] = 1.0 / len(g)
    return jnp.asarray(d)


def make_part2joint():
    """Up_Part2Joint == right-multiply by U2 (10 x 25), broadcast part -> joints."""
    u = np.zeros((N_PARTS, V_JOINTS), np.float32)
    for p, g in enumerate(_PART_GROUPS):
        u[p, g] = 1.0
    return jnp.asarray(u)


def make_part2body():
    """Down_Part2Body == right-multiply by E (10 x 5), avg-pool per body group."""
    e = np.zeros((N_PARTS, N_BODY), np.float32)
    for b, g in enumerate(_BODY_GROUPS):
        e[g, b] = 1.0 / len(g)
    return jnp.asarray(e)


def make_body2part():
    """Up_Body2Part == right-multiply by U1 (5 x 10), broadcast body -> parts."""
    u = np.zeros((N_BODY, N_PARTS), np.float32)
    for b, g in enumerate(_BODY_GROUPS):
        u[b, g] = 1.0
    return jnp.asarray(u)


def _round_up(a, m):
    return ((a + m - 1) // m) * m


def gchb3_kernel(x_ref,
                 kj_ref, bj_ref,
                 kp_ref, bp_ref,
                 kb_ref, bb_ref,
                 kup_ref, bup_ref,
                 kuj_ref, buj_ref,
                 o_ref):
    """One block = TB frames, flattened (padded channel*vertex, TB) layout.

    Dot operands are in the compute dtype (bf16 by default) with f32 MXU
    accumulation; bias-add / ReLU are in f32.
    """
    f32 = jnp.float32
    cd = x_ref.dtype
    x = x_ref[...]                                                   # (RJp, TB)

    # J_pre = GCN_J(J_in)
    j32 = jnp.maximum(
        jnp.dot(kj_ref[...], x, preferred_element_type=f32) + bj_ref[...], 0.0)
    j = j32.astype(cd)

    # P_pre = GCN_P(Down_J2P(J_pre))   (pooling folded into the operator)
    p32 = jnp.maximum(
        jnp.dot(kp_ref[...], j, preferred_element_type=f32) + bp_ref[...], 0.0)
    p = p32.astype(cd)

    # B_pre = GCN_B(Down_P2B(P_pre))
    b32 = jnp.maximum(
        jnp.dot(kb_ref[...], p, preferred_element_type=f32) + bb_ref[...], 0.0)
    bd = b32.astype(cd)

    # P_next = Up_GCN_P(cat(P_pre, Up_B2P(B_pre)))
    # merged operator: Kup = [Kup1 | Kup2] against row-stacked [p ; bd]
    pb = jnp.concatenate([p, bd], axis=0)                            # (RPp+RBp, TB)
    pn32 = jnp.maximum(
        jnp.dot(kup_ref[...], pb, preferred_element_type=f32) + bup_ref[...], 0.0)
    pn = pn32.astype(cd)

    # J_next = Up_GCN_J(cat(J_pre, Up_P2J(P_next)))
    # merged operator: Kuj = [Kuj1 | Kuj2] against row-stacked [j ; pn]
    jp = jnp.concatenate([j, pn], axis=0)                            # (RJp+RPp, TB)
    o32 = jnp.dot(kuj_ref[...], jp, preferred_element_type=f32) + buj_ref[...]
    o_ref[...] = jnp.maximum(o32, 0.0).astype(o_ref.dtype)


def gchb_3stages(J_in, params, *, compute_dtype=jnp.bfloat16, tb_max=4096):
    """J_in: (N, C, T, 25) float32  ->  (N, C, T, 25) float32."""
    N, C, T, V = J_in.shape
    assert V == V_JOINTS
    M = N * T
    cdt = jnp.dtype(compute_dtype)

    A, B, Cadj = params["A"], params["B"], params["Cadj"]
    D, U2 = make_joint2part(), make_part2joint()
    E, U1 = make_part2body(), make_body2part()

    Wj, bj = params["Wj"], params["bj"]
    Wp, bp = params["Wp"], params["bp"]
    Wb, bb = params["Wb"], params["bb"]
    Wup, bup = params["Wup"], params["bup"]
    Wuj, buj = params["Wuj"], params["buj"]

    RJ, RP, RB = C * V_JOINTS, C * N_PARTS, C * N_BODY
    SUB = 16                                  # sublane multiple (f32 and bf16)
    RJp, RPp, RBp = _round_up(RJ, SUB), _round_up(RP, SUB), _round_up(RB, SUB)

    def pad2(a, r, c):
        return jnp.pad(a, ((0, r - a.shape[0]), (0, c - a.shape[1])))

    # Fold every linear stage into a Kronecker operator acting on the flat
    # (channel*vertex, batch) layout; pad rows/cols to sublane multiples with
    # zeros (padded rows stay exactly zero through every stage).
    Kj = pad2(jnp.kron(Wj, A.T), RJp, RJp).astype(cdt)               # (RJp, RJp)
    bJ = pad2(jnp.kron(bj[:, 0], A.sum(0))[:, None], RJp, 1)
    Kp = pad2(jnp.kron(Wp, (D @ B).T), RPp, RJp).astype(cdt)         # (RPp, RJp)
    bP = pad2(jnp.kron(bp[:, 0], B.sum(0))[:, None], RPp, 1)
    Kb = pad2(jnp.kron(Wb, (E @ Cadj).T), RBp, RPp).astype(cdt)      # (RBp, RPp)
    bB = pad2(jnp.kron(bb[:, 0], Cadj.sum(0))[:, None], RBp, 1)
    Kup = jnp.concatenate(
        [pad2(jnp.kron(Wup[:, :C], B.T), RPp, RPp),
         pad2(jnp.kron(Wup[:, C:], (U1 @ B).T), RPp, RBp)],
        axis=1).astype(cdt)                                          # (RPp, RPp+RBp)
    bUP = pad2(jnp.kron(bup[:, 0], B.sum(0))[:, None], RPp, 1)
    Kuj = jnp.concatenate(
        [pad2(jnp.kron(Wuj[:, :C], A.T), RJp, RJp),
         pad2(jnp.kron(Wuj[:, C:], (U2 @ A).T), RJp, RPp)],
        axis=1).astype(cdt)                                          # (RJp, RJp+RPp)
    bUJ = pad2(jnp.kron(buj[:, 0], A.sum(0))[:, None], RJp, 1)

    # glue: (N, C, T, V) -> (C*V, N*T), batch on the lane axis.
    x = jnp.transpose(J_in, (1, 3, 0, 2)).reshape(RJ, M)

    # Adaptive batch tile: pad M only to a multiple of 128; prefer >=2 grid
    # steps (v7x megacore) and cap the tile at tb_max (VMEM headroom on v7x).
    M128 = _round_up(M, 128)
    if M128 <= 256:
        TB = M128
    elif M128 <= int(tb_max):
        TB = _round_up((M128 + 1) // 2, 128)
    else:
        TB = int(tb_max)
    M_pad = _round_up(M, TB)

    x = pad2(x, RJp, M_pad).astype(cdt)

    def full(a):
        return pl.BlockSpec(a.shape, lambda i: (0, 0))

    out = pl.pallas_call(
        gchb3_kernel,
        out_shape=jax.ShapeDtypeStruct((RJp, M_pad), jnp.float32),
        grid=(M_pad // TB,),
        in_specs=[
            pl.BlockSpec((RJp, TB), lambda i: (0, i)),   # activation block
            full(Kj), full(bJ),                          # GCN_J
            full(Kp), full(bP),                          # Down_J2P + GCN_P
            full(Kb), full(bB),                          # Down_P2B + GCN_B
            full(Kup), full(bUP),                        # Up_B2P + Up_GCN_P (merged)
            full(Kuj), full(bUJ),                        # Up_P2J + Up_GCN_J (merged)
        ],
        out_specs=pl.BlockSpec((RJp, TB), lambda i: (0, i)),
        compiler_params=pltpu.CompilerParams(
            dimension_semantics=("parallel",)),
    )(x, Kj, bJ, Kp, bP, Kb, bB, Kup, bUP, Kuj, bUJ)

    # glue: (RJp, M_pad) -> (N, C, T, V)
    out = out[:RJ, :M].reshape(C, V, N, T).transpose(2, 0, 3, 1)
    return out


def reference(J_in, params):
    """Pure-JAX, step-by-step (unfused) reference of the same forward pass."""
    A, B, Cadj = params["A"], params["B"], params["Cadj"]
    D, U2 = make_joint2part(), make_part2joint()
    E, U1 = make_part2body(), make_body2part()

    def gcn(x, W, b, Adj):
        h = jnp.einsum('oc,nctv->notv', W, x) + b[:, 0][None, :, None, None]
        return jnp.maximum(jnp.einsum('nctv,vw->nctw', h, Adj), 0.0)

    j_pre = gcn(J_in, params["Wj"], params["bj"], A)
    down1 = jnp.einsum('nctv,vp->nctp', j_pre, D)
    p_pre = gcn(down1, params["Wp"], params["bp"], B)
    down2 = jnp.einsum('nctp,pq->nctq', p_pre, E)
    b_pre = gcn(down2, params["Wb"], params["bb"], Cadj)
    up1 = jnp.einsum('nctq,qp->nctp', b_pre, U1)
    p_next = gcn(jnp.concatenate([p_pre, up1], axis=1),
                 params["Wup"], params["bup"], B)
    up2 = jnp.einsum('nctp,pv->nctv', p_next, U2)
    return gcn(jnp.concatenate([j_pre, up2], axis=1),
               params["Wuj"], params["buj"], A)


if __name__ == "__main__":
    N, dim, T, V = 2, 4, 16, V_JOINTS

    key = jax.random.PRNGKey(0)
    keys = jax.random.split(key, 16)

    params = {
        # GCN_J : Conv2d(dim, dim, 1) + adjacency A (25x25)
        "Wj": jax.random.normal(keys[0], (dim, dim), jnp.float32) * 0.3,
        "bj": jax.random.normal(keys[1], (dim, 1), jnp.float32) * 0.1,
        "A": jax.random.normal(keys[2], (V, V), jnp.float32) * 0.2,
        # GCN_P : Conv2d(dim, dim, 1) + adjacency B (10x10)
        "Wp": jax.random.normal(keys[3], (dim, dim), jnp.float32) * 0.3,
        "bp": jax.random.normal(keys[4], (dim, 1), jnp.float32) * 0.1,
        "B": jax.random.normal(keys[5], (N_PARTS, N_PARTS), jnp.float32) * 0.2,
        # GCN_B : Conv2d(dim, dim, 1) + adjacency C (5x5)
        "Wb": jax.random.normal(keys[6], (dim, dim), jnp.float32) * 0.3,
        "bb": jax.random.normal(keys[7], (dim, 1), jnp.float32) * 0.1,
        "Cadj": jax.random.normal(keys[8], (N_BODY, N_BODY), jnp.float32) * 0.2,
        # Up_GCN_P : Conv2d(2*dim, dim, 1)
        "Wup": jax.random.normal(keys[9], (dim, 2 * dim), jnp.float32) * 0.3,
        "bup": jax.random.normal(keys[10], (dim, 1), jnp.float32) * 0.1,
        # Up_GCN_J : Conv2d(2*dim, dim, 1)
        "Wuj": jax.random.normal(keys[11], (dim, 2 * dim), jnp.float32) * 0.3,
        "buj": jax.random.normal(keys[12], (dim, 1), jnp.float32) * 0.1,
    }

    J_in = jax.random.normal(keys[13], (N, dim, T, V), jnp.float32)
    ref = reference(J_in, params)

    # 1) exact f32-operand path: tight tolerance vs the unfused reference.
    out_f32 = jax.block_until_ready(
        gchb_3stages(J_in, params, compute_dtype=jnp.float32))
    np.testing.assert_allclose(np.asarray(out_f32), np.asarray(ref),
                               rtol=1e-4, atol=1e-4)

    # 2) default bf16-operand path (f32 accumulation): looser tolerance.
    out_bf16 = jax.block_until_ready(gchb_3stages(J_in, params))
    np.testing.assert_allclose(np.asarray(out_bf16), np.asarray(ref),
                               rtol=1e-1, atol=1e-1)

    # 3) larger batch -> exercises the multi-step "parallel" grid and the
    #    128-multiple batch padding path.
    J_big = jax.random.normal(keys[14], (2, dim, 300, V), jnp.float32)
    ref_big = reference(J_big, params)
    out_big = jax.block_until_ready(gchb_3stages(J_big, params))
    np.testing.assert_allclose(np.asarray(out_big), np.asarray(ref_big),
                               rtol=1e-1, atol=1e-1)

    print("KERNEL_OK")
</pallas_src>

<mosaic_0001>
module attributes {stable_mosaic.version = 11 : i64} {
  func.func @gchb3_kernel(%arg0: i32, %arg1: memref<112x128xf32, #tpu.memory_space<vmem>>, %arg2: memref<112x112xf32, #tpu.memory_space<vmem>>, %arg3: memref<112x1xf32, #tpu.memory_space<vmem>>, %arg4: memref<48x112xf32, #tpu.memory_space<vmem>>, %arg5: memref<48x1xf32, #tpu.memory_space<vmem>>, %arg6: memref<32x48xf32, #tpu.memory_space<vmem>>, %arg7: memref<32x1xf32, #tpu.memory_space<vmem>>, %arg8: memref<48x80xf32, #tpu.memory_space<vmem>>, %arg9: memref<48x1xf32, #tpu.memory_space<vmem>>, %arg10: memref<112x160xf32, #tpu.memory_space<vmem>>, %arg11: memref<112x1xf32, #tpu.memory_space<vmem>>, %arg12: memref<112x128xf32, #tpu.memory_space<vmem>>) attributes {dimension_semantics = [#tpu.dimension_semantics<parallel>], iteration_bounds = array<i64: 1>, scalar_prefetch = 0 : i64, scratch_operands = 0 : i64, tpu.core_type = #tpu.core_type<tc>, window_params = [{transform_indices = @transform_0, window_bounds = array<i64: 112, 128>}, {pipeline_mode = #tpu.pipeline_mode<synchronous>, transform_indices = @transform_1, window_bounds = array<i64: 112, 112>}, {pipeline_mode = #tpu.pipeline_mode<synchronous>, transform_indices = @transform_2, window_bounds = array<i64: 112, 1>}, {pipeline_mode = #tpu.pipeline_mode<synchronous>, transform_indices = @transform_3, window_bounds = array<i64: 48, 112>}, {pipeline_mode = #tpu.pipeline_mode<synchronous>, transform_indices = @transform_4, window_bounds = array<i64: 48, 1>}, {pipeline_mode = #tpu.pipeline_mode<synchronous>, transform_indices = @transform_5, window_bounds = array<i64: 32, 48>}, {pipeline_mode = #tpu.pipeline_mode<synchronous>, transform_indices = @transform_6, window_bounds = array<i64: 32, 1>}, {pipeline_mode = #tpu.pipeline_mode<synchronous>, transform_indices = @transform_7, window_bounds = array<i64: 48, 80>}, {pipeline_mode = #tpu.pipeline_mode<synchronous>, transform_indices = @transform_8, window_bounds = array<i64: 48, 1>}, {pipeline_mode = #tpu.pipeline_mode<synchronous>, transform_indices = @transform_9, window_bounds = array<i64: 112, 160>}, {pipeline_mode = #tpu.pipeline_mode<synchronous>, transform_indices = @transform_10, window_bounds = array<i64: 112, 1>}, {transform_indices = @transform_11, window_bounds = array<i64: 112, 128>}]} {
    %c0 = arith.constant 0 : index
    %c0_0 = arith.constant 0 : index
    %0 = vector.load %arg1[%c0, %c0_0] : memref<112x128xf32, #tpu.memory_space<vmem>>, vector<112x128xf32>
    %c0_1 = arith.constant 0 : index
    %c0_2 = arith.constant 0 : index
    %1 = vector.load %arg2[%c0_1, %c0_2] : memref<112x112xf32, #tpu.memory_space<vmem>>, vector<112x112xf32>
    %cst = arith.constant dense<0.000000e+00> : vector<112x128xf32>
    %2 = tpu.matmul %1, %0, %cst {dimension_numbers = #tpu.dot_dimension_numbers<[1], [0], [0], [1], [0, 0, 1, 1], [], []>} : vector<112x112xf32>, vector<112x128xf32>, vector<112x128xf32> -> vector<112x128xf32>
    %c0_3 = arith.constant 0 : index
    %c0_4 = arith.constant 0 : index
    %3 = vector.load %arg3[%c0_3, %c0_4] : memref<112x1xf32, #tpu.memory_space<vmem>>, vector<112x1xf32>
    %4 = vector.broadcast %3 : vector<112x1xf32> to vector<112x128xf32>
    %5 = arith.addf %2, %4 : vector<112x128xf32>
    %cst_5 = arith.constant 0.000000e+00 : f32
    %6 = vector.broadcast %cst_5 : f32 to vector<112x128xf32>
    %7 = arith.maximumf %5, %6 : vector<112x128xf32>
    %c0_6 = arith.constant 0 : index
    %c0_7 = arith.constant 0 : index
    %8 = vector.load %arg4[%c0_6, %c0_7] : memref<48x112xf32, #tpu.memory_space<vmem>>, vector<48x112xf32>
    %cst_8 = arith.constant dense<0.000000e+00> : vector<48x128xf32>
    %9 = tpu.matmul %8, %7, %cst_8 {dimension_numbers = #tpu.dot_dimension_numbers<[1], [0], [0], [1], [0, 0, 1, 1], [], []>} : vector<48x112xf32>, vector<112x128xf32>, vector<48x128xf32> -> vector<48x128xf32>
    %c0_9 = arith.constant 0 : index
    %c0_10 = arith.constant 0 : index
    %10 = vector.load %arg5[%c0_9, %c0_10] : memref<48x1xf32, #tpu.memory_space<vmem>>, vector<48x1xf32>
    %11 = vector.broadcast %10 : vector<48x1xf32> to vector<48x128xf32>
    %12 = arith.addf %9, %11 : vector<48x128xf32>
    %cst_11 = arith.constant 0.000000e+00 : f32
    %13 = vector.broadcast %cst_11 : f32 to vector<48x128xf32>
    %14 = arith.maximumf %12, %13 : vector<48x128xf32>
    %c0_12 = arith.constant 0 : index
    %c0_13 = arith.constant 0 : index
    %15 = vector.load %arg6[%c0_12, %c0_13] : memref<32x48xf32, #tpu.memory_space<vmem>>, vector<32x48xf32>
    %cst_14 = arith.constant dense<0.000000e+00> : vector<32x128xf32>
    %16 = tpu.matmul %15, %14, %cst_14 {dimension_numbers = #tpu.dot_dimension_numbers<[1], [0], [0], [1], [0, 0, 1, 1], [], []>} : vector<32x48xf32>, vector<48x128xf32>, vector<32x128xf32> -> vector<32x128xf32>
    %c0_15 = arith.constant 0 : index
    %c0_16 = arith.constant 0 : index
    %17 = vector.load %arg7[%c0_15, %c0_16] : memref<32x1xf32, #tpu.memory_space<vmem>>, vector<32x1xf32>
    %18 = vector.broadcast %17 : vector<32x1xf32> to vector<32x128xf32>
    %19 = arith.addf %16, %18 : vector<32x128xf32>
    %cst_17 = arith.constant 0.000000e+00 : f32
    %20 = vector.broadcast %cst_17 : f32 to vector<32x128xf32>
    %21 = arith.maximumf %19, %20 : vector<32x128xf32>
    %22 = tpu.concatenate %14, %21 in 0 : vector<48x128xf32>, vector<32x128xf32> -> vector<80x128xf32>
    %c0_18 = arith.constant 0 : index
    %c0_19 = arith.constant 0 : index
    %23 = vector.load %arg8[%c0_18, %c0_19] : memref<48x80xf32, #tpu.memory_space<vmem>>, vector<48x80xf32>
    %cst_20 = arith.constant dense<0.000000e+00> : vector<48x128xf32>
    %24 = tpu.matmul %23, %22, %cst_20 {dimension_numbers = #tpu.dot_dimension_numbers<[1], [0], [0], [1], [0, 0, 1, 1], [], []>} : vector<48x80xf32>, vector<80x128xf32>, vector<48x128xf32> -> vector<48x128xf32>
    %c0_21 = arith.constant 0 : index
    %c0_22 = arith.constant 0 : index
    %25 = vector.load %arg9[%c0_21, %c0_22] : memref<48x1xf32, #tpu.memory_space<vmem>>, vector<48x1xf32>
    %26 = vector.broadcast %25 : vector<48x1xf32> to vector<48x128xf32>
    %27 = arith.addf %24, %26 : vector<48x128xf32>
    %cst_23 = arith.constant 0.000000e+00 : f32
    %28 = vector.broadcast %cst_23 : f32 to vector<48x128xf32>
    %29 = arith.maximumf %27, %28 : vector<48x128xf32>
    %30 = tpu.concatenate %7, %29 in 0 : vector<112x128xf32>, vector<48x128xf32> -> vector<160x128xf32>
    %c0_24 = arith.constant 0 : index
    %c0_25 = arith.constant 0 : index
    %31 = vector.load %arg10[%c0_24, %c0_25] : memref<112x160xf32, #tpu.memory_space<vmem>>, vector<112x160xf32>
    %cst_26 = arith.constant dense<0.000000e+00> : vector<112x128xf32>
    %32 = tpu.matmul %31, %30, %cst_26 {dimension_numbers = #tpu.dot_dimension_numbers<[1], [0], [0], [1], [0, 0, 1, 1], [], []>} : vector<112x160xf32>, vector<160x128xf32>, vector<112x128xf32> -> vector<112x128xf32>
    %c0_27 = arith.constant 0 : index
    %c0_28 = arith.constant 0 : index
    %33 = vector.load %arg11[%c0_27, %c0_28] : memref<112x1xf32, #tpu.memory_space<vmem>>, vector<112x1xf32>
    %34 = vector.broadcast %33 : vector<112x1xf32> to vector<112x128xf32>
    %35 = arith.addf %32, %34 : vector<112x128xf32>
    %cst_29 = arith.constant 0.000000e+00 : f32
    %36 = vector.broadcast %cst_29 : f32 to vector<112x128xf32>
    %37 = arith.maximumf %35, %36 : vector<112x128xf32>
    %c0_30 = arith.constant 0 : index
    %c0_31 = arith.constant 0 : index
    %38 = vector.load %arg12[%c0_30, %c0_31] : memref<112x128xf32, #tpu.memory_space<vmem>>, vector<112x128xf32>
    tpu.vector_store %arg12[%c0_30, %c0_31], %37 {strides = array<i32>} : memref<112x128xf32, #tpu.memory_space<vmem>>, vector<112x128xf32>,
    return
  }
  func.func @transform_0(%arg0: i32) -> (i32, i32) {
    %c0_i32 = arith.constant 0 : i32
    %c0_i32_0 = arith.constant 0 : i32
    return %c0_i32, %arg0 : i32, i32
  }
  func.func @transform_1(%arg0: i32) -> (i32, i32) {
    %c0_i32 = arith.constant 0 : i32
    %c0_i32_0 = arith.constant 0 : i32
    %c0_i32_1 = arith.constant 0 : i32
    return %c0_i32, %c0_i32_0 : i32, i32
  }
  func.func @transform_2(%arg0: i32) -> (i32, i32) {
    %c0_i32 = arith.constant 0 : i32
    %c0_i32_0 = arith.constant 0 : i32
    %c0_i32_1 = arith.constant 0 : i32
    return %c0_i32, %c0_i32_0 : i32, i32
  }
  func.func @transform_3(%arg0: i32) -> (i32, i32) {
    %c0_i32 = arith.constant 0 : i32
    %c0_i32_0 = arith.constant 0 : i32
    %c0_i32_1 = arith.constant 0 : i32
    return %c0_i32, %c0_i32_0 : i32, i32
  }
  func.func @transform_4(%arg0: i32) -> (i32, i32) {
    %c0_i32 = arith.constant 0 : i32
    %c0_i32_0 = arith.constant 0 : i32
    %c0_i32_1 = arith.constant 0 : i32
    return %c0_i32, %c0_i32_0 : i32, i32
  }
  func.func @transform_5(%arg0: i32) -> (i32, i32) {
    %c0_i32 = arith.constant 0 : i32
    %c0_i32_0 = arith.constant 0 : i32
    %c0_i32_1 = arith.constant 0 : i32
    return %c0_i32, %c0_i32_0 : i32, i32
  }
  func.func @transform_6(%arg0: i32) -> (i32, i32) {
    %c0_i32 = arith.constant 0 : i32
    %c0_i32_0 = arith.constant 0 : i32
    %c0_i32_1 = arith.constant 0 : i32
    return %c0_i32, %c0_i32_0 : i32, i32
  }
  func.func @transform_7(%arg0: i32) -> (i32, i32) {
    %c0_i32 = arith.constant 0 : i32
    %c0_i32_0 = arith.constant 0 : i32
    %c0_i32_1 = arith.constant 0 : i32
    return %c0_i32, %c0_i32_0 : i32, i32
  }
  func.func @transform_8(%arg0: i32) -> (i32, i32) {
    %c0_i32 = arith.constant 0 : i32
    %c0_i32_0 = arith.constant 0 : i32
    %c0_i32_1 = arith.constant 0 : i32
    return %c0_i32, %c0_i32_0 : i32, i32
  }
  func.func @transform_9(%arg0: i32) -> (i32, i32) {
    %c0_i32 = arith.constant 0 : i32
    %c0_i32_0 = arith.constant 0 : i32
    %c0_i32_1 = arith.constant 0 : i32
    return %c0_i32, %c0_i32_0 : i32, i32
  }
  func.func @transform_10(%arg0: i32) -> (i32, i32) {
    %c0_i32 = arith.constant 0 : i32
    %c0_i32_0 = arith.constant 0 : i32
    %c0_i32_1 = arith.constant 0 : i32
    return %c0_i32, %c0_i32_0 : i32, i32
  }
  func.func @transform_11(%arg0: i32) -> (i32, i32) {
    %c0_i32 = arith.constant 0 : i32
    %c0_i32_0 = arith.constant 0 : i32
    return %c0_i32, %arg0 : i32, i32
  }
}

</mosaic_0001>

<llo_original>
// kernel: tpu_custom_call.1
$region0: #{tpu_custom_call.1}
  #allocation0 [shape = 'u32[]', space=smem, size = 0x4, offset = 0x4, fixed_abs, tag = 'smem constant byte address 0x4 - core index']
  #allocation1 [shape = 'u32[144,128]{1,0:T(1,128)}', space=vmem, size = 0x12000, scoped, tag = 'internal scratch']
  %s0 = inlined_call_operand.vmem [shape: f32[112,128], index: 0, kind: input, shape index: {}]
  %s1 = inlined_call_operand.vmem [shape: f32[112,112], index: 1, kind: input, shape index: {}]
  %s2 = inlined_call_operand.vmem [shape: f32[112,1], index: 2, kind: input, shape index: {}]
  %s3 = inlined_call_operand.vmem [shape: f32[48,112], index: 3, kind: input, shape index: {}]
  %s4 = inlined_call_operand.vmem [shape: f32[48,1], index: 4, kind: input, shape index: {}]
  %s5 = inlined_call_operand.vmem [shape: f32[32,48], index: 5, kind: input, shape index: {}]
  %s6 = inlined_call_operand.vmem [shape: f32[32,1], index: 6, kind: input, shape index: {}]
  %s7 = inlined_call_operand.vmem [shape: f32[48,80], index: 7, kind: input, shape index: {}]
  %s8 = inlined_call_operand.vmem [shape: f32[48,1], index: 8, kind: input, shape index: {}]
  %s9 = inlined_call_operand.vmem [shape: f32[112,160], index: 9, kind: input, shape index: {}]
  %s10 = inlined_call_operand.vmem [shape: f32[112,1], index: 10, kind: input, shape index: {}]
  %s11 = inlined_call_operand.hbm [shape: f32[112,128], index: 11, kind: output, shape index: {}]
  %s12 = sld [smem:[#allocation0]]
  $region54: #{tpu_custom_call.1} parent=0
    _
  %s14 = ssub.s32 1, %s12
  %s15 = scalar_select 0, %s14, %s12
  $region1: #{tpu_custom_call.1} parent=0
    #allocation2 [shape = 'u8[57344]{0}', space=vmem, size = 0xe000, scoped, tag = 'output window, operand 0, single buffered']
    #allocation3 [shape = 's32[1]{0}', space=sflag, size = 0x4, scoped, tag = 'scoped memory for tpu_custom_call.1']
    %16 = vsyncpa [#allocation3], 0
    // Predicated region
    $region2: #{tpu_custom_call.1} parent=1 // pred_check
      _
    $region3: #{tpu_custom_call.1} parent=1 // pred_check_branch
      %18 = sbr.rel (0) target = $region5
    $region4: #{tpu_custom_call.1} parent=1 // pred_region
      _
    $region5: #{tpu_custom_call.1} parent=1 // pred_fallthru
      _
    // Predicated region
    $region6: #{tpu_custom_call.1} parent=1 // pred_check
      _
    $region7: #{tpu_custom_call.1} parent=1 // pred_check_branch
      %20 = sbr.rel (0) target = $region9
    $region8: #{tpu_custom_call.1} parent=1 // pred_region
      _
    $region9: #{tpu_custom_call.1} parent=1 // pred_fallthru
      _
    // Predicated region
    $region10: #{tpu_custom_call.1} parent=1 // pred_check
      _
    $region11: #{tpu_custom_call.1} parent=1 // pred_check_branch
      %22 = sbr.rel (0) target = $region13
    $region12: #{tpu_custom_call.1} parent=1 // pred_region
      _
    $region13: #{tpu_custom_call.1} parent=1 // pred_fallthru
      _
    // Predicated region
    $region14: #{tpu_custom_call.1} parent=1 // pred_check
      _
    $region15: #{tpu_custom_call.1} parent=1 // pred_check_branch
      %24 = sbr.rel (0) target = $region17
    $region16: #{tpu_custom_call.1} parent=1 // pred_region
      _
    $region17: #{tpu_custom_call.1} parent=1 // pred_fallthru
      _
    // Predicated region
    $region18: #{tpu_custom_call.1} parent=1 // pred_check
      _
    $region19: #{tpu_custom_call.1} parent=1 // pred_check_branch
      %26 = sbr.rel (0) target = $region21
    $region20: #{tpu_custom_call.1} parent=1 // pred_region
      _
    $region21: #{tpu_custom_call.1} parent=1 // pred_fallthru
      _
    // Predicated region
    $region22: #{tpu_custom_call.1} parent=1 // pred_check
      _
    $region23: #{tpu_custom_call.1} parent=1 // pred_check_branch
      %28 = sbr.rel (0) target = $region25
    $region24: #{tpu_custom_call.1} parent=1 // pred_region
      _
    $region25: #{tpu_custom_call.1} parent=1 // pred_fallthru
      _
    // Predicated region
    $region26: #{tpu_custom_call.1} parent=1 // pred_check
      _
    $region27: #{tpu_custom_call.1} parent=1 // pred_check_branch
      %30 = sbr.rel (0) target = $region29
    $region28: #{tpu_custom_call.1} parent=1 // pred_region
      _
    $region29: #{tpu_custom_call.1} parent=1 // pred_fallthru
      _
    // Predicated region
    $region30: #{tpu_custom_call.1} parent=1 // pred_check
      _
    $region31: #{tpu_custom_call.1} parent=1 // pred_check_branch
      %32 = sbr.rel (0) target = $region33
    $region32: #{tpu_custom_call.1} parent=1 // pred_region
      _
    $region33: #{tpu_custom_call.1} parent=1 // pred_fallthru
      _
    // Predicated region
    $region34: #{tpu_custom_call.1} parent=1 // pred_check
      _
    $region35: #{tpu_custom_call.1} parent=1 // pred_check_branch
      %34 = sbr.rel (0) target = $region37
    $region36: #{tpu_custom_call.1} parent=1 // pred_region
      _
    $region37: #{tpu_custom_call.1} parent=1 // pred_fallthru
      _
    // Predicated region
    $region38: #{tpu_custom_call.1} parent=1 // pred_check
      _
    $region39: #{tpu_custom_call.1} parent=1 // pred_check_branch
      %36 = sbr.rel (0) target = $region41
    $region40: #{tpu_custom_call.1} parent=1 // pred_region
      _
    $region41: #{tpu_custom_call.1} parent=1 // pred_fallthru
      _
    // Predicated region
    $region42: #{tpu_custom_call.1} parent=1 // pred_check
      _
    $region43: #{tpu_custom_call.1} parent=1 // pred_check_branch
      %38 = sbr.rel (0) target = $region45
    $region44: #{tpu_custom_call.1} parent=1 // pred_region
      _
    $region45: #{tpu_custom_call.1} parent=1 // pred_fallthru
      _
    %v39 = vld [vmem:[%s0] sm:$0xff]
    %v40 = vld [vmem:[%s0 + $0x8] sm:$0xff]
    %v41 = vld [vmem:[%s0 + $0x10] sm:$0xff]
    %v42 = vld [vmem:[%s0 + $0x18] sm:$0xff]
    %v43 = vld [vmem:[%s0 + $0x20] sm:$0xff]
    %v44 = vld [vmem:[%s0 + $0x28] sm:$0xff]
    %v45 = vld [vmem:[%s0 + $0x30] sm:$0xff]
    %v46 = vld [vmem:[%s0 + $0x38] sm:$0xff]
    %v47 = vld [vmem:[%s0 + $0x40] sm:$0xff]
    %v48 = vld [vmem:[%s0 + $0x48] sm:$0xff]
    %v49 = vld [vmem:[%s0 + $0x50] sm:$0xff]
    %v50 = vld [vmem:[%s0 + $0x58] sm:$0xff]
    %v51 = vld [vmem:[%s0 + $0x60] sm:$0xff]
    %v52 = vld [vmem:[%s0 + $0x68] sm:$0xff]
    %v53 = vld [vmem:[%s1] sm:$0xff]
    %v54 = vld [vmem:[%s1 + $0x8] sm:$0xff]
    %v55 = vld [vmem:[%s1 + $0x10] sm:$0xff]
    %v56 = vld [vmem:[%s1 + $0x18] sm:$0xff]
    %v57 = vld [vmem:[%s1 + $0x20] sm:$0xff]
    %v58 = vld [vmem:[%s1 + $0x28] sm:$0xff]
    %v59 = vld [vmem:[%s1 + $0x30] sm:$0xff]
    %v60 = vld [vmem:[%s1 + $0x38] sm:$0xff]
    %v61 = vld [vmem:[%s1 + $0x40] sm:$0xff]
    %v62 = vld [vmem:[%s1 + $0x48] sm:$0xff]
    %v63 = vld [vmem:[%s1 + $0x50] sm:$0xff]
    %v64 = vld [vmem:[%s1 + $0x58] sm:$0xff]
    %v65 = vld [vmem:[%s1 + $0x60] sm:$0xff]
    %v66 = vld [vmem:[%s1 + $0x68] sm:$0xff]
    %v67 = vld [vmem:[%s2] sm:$0xff]
    %v68 = vld [vmem:[%s2 + $0x8] sm:$0xff]
    %v69 = vld [vmem:[%s2 + $0x10] sm:$0xff]
    %v70 = vld [vmem:[%s2 + $0x18] sm:$0xff]
    %v71 = vld [vmem:[%s2 + $0x20] sm:$0xff]
    %v72 = vld [vmem:[%s2 + $0x28] sm:$0xff]
    %v73 = vld [vmem:[%s2 + $0x30] sm:$0xff]
    %v74 = vld [vmem:[%s2 + $0x38] sm:$0xff]
    %v75 = vld [vmem:[%s2 + $0x40] sm:$0xff]
    %v76 = vld [vmem:[%s2 + $0x48] sm:$0xff]
    %v77 = vld [vmem:[%s2 + $0x50] sm:$0xff]
    %v78 = vld [vmem:[%s2 + $0x58] sm:$0xff]
    %v79 = vld [vmem:[%s2 + $0x60] sm:$0xff]
    %v80 = vld [vmem:[%s2 + $0x68] sm:$0xff]
    %82 = vset.pattern.permute.xlu0 0
    %83 = vperm.xlu0 %82, %v67
    %v84 = vpop.permute.xlu0 %83
    %87 = vset.pattern.permute.xlu0 0
    %88 = vperm.xlu0 %87, %v68
    %v89 = vpop.permute.xlu0 %88
    %92 = vset.pattern.permute.xlu0 0
    %93 = vperm.xlu0 %92, %v69
    %v94 = vpop.permute.xlu0 %93
    %97 = vset.pattern.permute.xlu0 0
    %98 = vperm.xlu0 %97, %v70
    %v99 = vpop.permute.xlu0 %98
    %102 = vset.pattern.permute.xlu0 0
    %103 = vperm.xlu0 %102, %v71
    %v104 = vpop.permute.xlu0 %103
    %107 = vset.pattern.permute.xlu0 0
    %108 = vperm.xlu0 %107, %v72
    %v109 = vpop.permute.xlu0 %108
    %112 = vset.pattern.permute.xlu0 0
    %113 = vperm.xlu0 %112, %v73
    %v114 = vpop.permute.xlu0 %113
    %117 = vset.pattern.permute.xlu0 0
    %118 = vperm.xlu0 %117, %v74
    %v119 = vpop.permute.xlu0 %118
    %122 = vset.pattern.permute.xlu0 0
    %123 = vperm.xlu0 %122, %v75
    %v124 = vpop.permute.xlu0 %123
    %127 = vset.pattern.permute.xlu0 0
    %128 = vperm.xlu0 %127, %v76
    %v129 = vpop.permute.xlu0 %128
    %132 = vset.pattern.permute.xlu0 0
    %133 = vperm.xlu0 %132, %v77
    %v134 = vpop.permute.xlu0 %133
    %137 = vset.pattern.permute.xlu0 0
    %138 = vperm.xlu0 %137, %v78
    %v139 = vpop.permute.xlu0 %138
    %142 = vset.pattern.permute.xlu0 0
    %143 = vperm.xlu0 %142, %v79
    %v144 = vpop.permute.xlu0 %143
    %147 = vset.pattern.permute.xlu0 0
    %148 = vperm.xlu0 %147, %v80
    %v149 = vpop.permute.xlu0 %148
    %vm151 = vcmask 916480
    %v153 = vsel %vm151, %v53, 0
    %v156 = vsel %vm151, %v54, 0
    %v159 = vsel %vm151, %v55, 0
    %v162 = vsel %vm151, %v56, 0
    %v165 = vsel %vm151, %v57, 0
    %v168 = vsel %vm151, %v58, 0
    %v171 = vsel %vm151, %v59, 0
    %v174 = vsel %vm151, %v60, 0
    %v177 = vsel %vm151, %v61, 0
    %v180 = vsel %vm151, %v62, 0
    %v183 = vsel %vm151, %v63, 0
    %v186 = vsel %vm151, %v64, 0
    %v189 = vsel %vm151, %v65, 0
    %v192 = vsel %vm151, %v66, 0
    %194 = vmatprep.subr.mxu0 0.0
    %195 = vmatpush1.msra.mxu0 %v39
    %196 = vmatprep.subr.mxu0 0.0
    %197 = vmatpush1.msra.mxu0 %v40
    %198 = vmatprep.subr.mxu0 0.0
    %199 = vmatpush1.msra.mxu0 %v41
    %200 = vmatprep.subr.mxu0 0.0
    %201 = vmatpush1.msra.mxu0 %v42
    %202 = vmatprep.subr.mxu0 0.0
    %203 = vmatpush1.msra.mxu0 %v43
    %204 = vmatprep.subr.mxu0 0.0
    %205 = vmatpush1.msra.mxu0 %v44
    %206 = vmatprep.subr.mxu0 0.0
    %207 = vmatpush1.msra.mxu0 %v45
    %208 = vmatprep.subr.mxu0 0.0
    %209 = vmatpush1.msra.mxu0 %v46
    %210 = vmatprep.subr.mxu0 0.0
    %211 = vmatpush1.msra.mxu0 %v47
    %212 = vmatprep.subr.mxu0 0.0
    %213 = vmatpush1.msra.mxu0 %v48
    %214 = vmatprep.subr.mxu0 0.0
    %215 = vmatpush1.msra.mxu0 %v49
    %216 = vmatprep.subr.mxu0 0.0
    %217 = vmatpush1.msra.mxu0 %v50
    %218 = vmatprep.subr.mxu0 0.0
    %219 = vmatpush1.msra.mxu0 %v51
    %220 = vmatprep.subr.mxu0 0.0
    %221 = vmatpush1.msra.mxu0 %v52
    %222 = vmatprep.subr.mxu0 0.0
    %223 = vmatpush1.msra.mxu0 0.0
    %224 = vmatprep.subr.mxu0 0.0
    %225 = vmatpush1.msra.mxu0 0.0
    %226 = vmatprep.subr.mxu0 0.0
    %227 = vmatpush1.msra.mxu0 0.0
    %228 = vmatprep.subr.mxu0 0.0
    %229 = vmatpush1.msra.mxu0 0.0
    %230 = vmatprep.subr.mxu0 0.0
    %231 = vmatpush1.msra.mxu0 0.0
    %232 = vmatprep.subr.mxu0 0.0
    %233 = vmatpush1.msra.mxu0 0.0
    %234 = vmatprep.subr.mxu0 0.0
    %235 = vmatpush1.msra.mxu0 0.0
    %236 = vmatprep.subr.mxu0 0.0
    %237 = vmatpush1.msra.mxu0 0.0
    %238 = vmatprep.subr.mxu0 0.0
    %239 = vmatpush1.msra.mxu0 0.0
    %240 = vmatprep.subr.mxu0 0.0
    %241 = vmatpush1.msra.mxu0 0.0
    %242 = vmatprep.subr.mxu0 0.0
    %243 = vmatpush1.msra.mxu0 0.0
    %244 = vmatprep.subr.mxu0 0.0
    %245 = vmatpush1.msra.mxu0 0.0
    %246 = vmatprep.subr.mxu0 0.0
    %247 = vmatpush1.msra.mxu0 0.0
    %248 = vmatprep.subr.mxu0 0.0
    %249 = vmatpush1.msra.mxu0 0.0
    %250 = vmatprep.subr.mxu0 0.0
    %251 = vmatpush1.msra.mxu0 0.0
    %252 = vmatprep.subr.mxu0 0.0
    %253 = vmatpush1.msra.mxu0 0.0
    %254 = vmatprep.subr.mxu0 0.0
    %255 = vmatpush1.msra.mxu0 0.0
    %256 = vmatprep.subr.mxu0 0.0
    %257 = vmatpush1.msra.mxu0 0.0
    %258 = vmatprep.mubr.f32.mxu0 0.0
    %259 = vmatmul.mubr.f32.gmra.mrb[0].mxu0 %v153
    %v260 = vpop.f32.mrb[0].mxu0
    %v261 = vadd.f32 %v84, %v260
    %v262 = vpop.f32.mrb[0].mxu0
    %263 = vmatprep.mubr.f32.mxu0 0.0
    %264 = vmatmul.mubr.f32.gmra.mrb[0].mxu0 %v156
    %v265 = vpop.f32.mrb[0].mxu0
    %v266 = vadd.f32 %v89, %v265
    %v267 = vpop.f32.mrb[0].mxu0
    %268 = vmatprep.mubr.f32.mxu0 0.0
    %269 = vmatmul.mubr.f32.gmra.mrb[0].mxu0 %v159
    %v270 = vpop.f32.mrb[0].mxu0
    %v271 = vadd.f32 %v94, %v270
    %v272 = vpop.f32.mrb[0].mxu0
    %273 = vmatprep.mubr.f32.mxu0 0.0
    %274 = vmatmul.mubr.f32.gmra.mrb[0].mxu0 %v162
    %v275 = vpop.f32.mrb[0].mxu0
    %v276 = vadd.f32 %v99, %v275
    %v277 = vpop.f32.mrb[0].mxu0
    %278 = vmatprep.mubr.f32.mxu0 0.0
    %279 = vmatmul.mubr.f32.gmra.mrb[0].mxu0 %v165
    %v280 = vpop.f32.mrb[0].mxu0
    %v281 = vadd.f32 %v104, %v280
    %v282 = vpop.f32.mrb[0].mxu0
    %283 = vmatprep.mubr.f32.mxu0 0.0
    %284 = vmatmul.mubr.f32.gmra.mrb[0].mxu0 %v168
    %v285 = vpop.f32.mrb[0].mxu0
    %v286 = vadd.f32 %v109, %v285
    %v287 = vpop.f32.mrb[0].mxu0
    %288 = vmatprep.mubr.f32.mxu0 0.0
    %289 = vmatmul.mubr.f32.gmra.mrb[0].mxu0 %v171
    %v290 = vpop.f32.mrb[0].mxu0
    %v291 = vadd.f32 %v114, %v290
    %v292 = vpop.f32.mrb[0].mxu0
    %293 = vmatprep.mubr.f32.mxu0 0.0
    %294 = vmatmul.mubr.f32.gmra.mrb[0].mxu0 %v174
    %v295 = vpop.f32.mrb[0].mxu0
    %v296 = vadd.f32 %v119, %v295
    %v297 = vpop.f32.mrb[0].mxu0
    %298 = vmatprep.mubr.f32.mxu0 0.0
    %299 = vmatmul.mubr.f32.gmra.mrb[0].mxu0 %v177
    %v300 = vpop.f32.mrb[0].mxu0
    %v301 = vadd.f32 %v124, %v300
    %v302 = vpop.f32.mrb[0].mxu0
    %303 = vmatprep.mubr.f32.mxu0 0.0
    %304 = vmatmul.mubr.f32.gmra.mrb[0].mxu0 %v180
    %v305 = vpop.f32.mrb[0].mxu0
    %v306 = vadd.f32 %v129, %v305
    %v307 = vpop.f32.mrb[0].mxu0
    %308 = vmatprep.mubr.f32.mxu0 0.0
    %309 = vmatmul.mubr.f32.gmra.mrb[0].mxu0 %v183
    %v310 = vpop.f32.mrb[0].mxu0
    %v311 = vadd.f32 %v134, %v310
    %v312 = vpop.f32.mrb[0].mxu0
    %313 = vmatprep.mubr.f32.mxu0 0.0
    %314 = vmatmul.mubr.f32.gmra.mrb[0].mxu0 %v186
    %v315 = vpop.f32.mrb[0].mxu0
    %v316 = vadd.f32 %v139, %v315
    %v317 = vpop.f32.mrb[0].mxu0
    %318 = vmatprep.mubr.f32.mxu0 0.0
    %319 = vmatmul.mubr.f32.gmra.mrb[0].mxu0 %v189
    %v320 = vpop.f32.mrb[0].mxu0
    %v321 = vadd.f32 %v144, %v320
    %v322 = vpop.f32.mrb[0].mxu0
    %323 = vmatprep.mubr.f32.mxu0 0.0
    %324 = vmatmul.mubr.f32.gmra.mrb[0].mxu0 %v192
    %v325 = vpop.f32.mrb[0].mxu0
    %v326 = vadd.f32 %v149, %v325
    %v327 = vpop.f32.mrb[0].mxu0
    %328 = vdwg.mxu0
    %v329 = vmax.f32 %v261, 0.0
    %v330 = vmax.f32 %v266, 0.0
    %v331 = vmax.f32 %v271, 0.0
    %v332 = vmax.f32 %v276, 0.0
    %v333 = vmax.f32 %v281, 0.0
    %v334 = vmax.f32 %v286, 0.0
    %v335 = vmax.f32 %v291, 0.0
    %v336 = vmax.f32 %v296, 0.0
    %v337 = vmax.f32 %v301, 0.0
    %v338 = vmax.f32 %v306, 0.0
    %v339 = vmax.f32 %v311, 0.0
    %v340 = vmax.f32 %v316, 0.0
    %v341 = vmax.f32 %v321, 0.0
    %v342 = vmax.f32 %v326, 0.0
    %v343 = vld [vmem:[%s3] sm:$0xff]
    %v344 = vld [vmem:[%s3 + $0x8] sm:$0xff]
    %v345 = vld [vmem:[%s3 + $0x10] sm:$0xff]
    %v346 = vld [vmem:[%s3 + $0x18] sm:$0xff]
    %v347 = vld [vmem:[%s3 + $0x20] sm:$0xff]
    %v348 = vld [vmem:[%s3 + $0x28] sm:$0xff]
    %v349 = vld [vmem:[%s4] sm:$0xff]
    %v350 = vld [vmem:[%s4 + $0x8] sm:$0xff]
    %v351 = vld [vmem:[%s4 + $0x10] sm:$0xff]
    %v352 = vld [vmem:[%s4 + $0x18] sm:$0xff]
    %v353 = vld [vmem:[%s4 + $0x20] sm:$0xff]
    %v354 = vld [vmem:[%s4 + $0x28] sm:$0xff]
    %356 = vset.pattern.permute.xlu0 0
    %357 = vperm.xlu0 %356, %v349
    %v358 = vpop.permute.xlu0 %357
    %361 = vset.pattern.permute.xlu0 0
    %362 = vperm.xlu0 %361, %v350
    %v363 = vpop.permute.xlu0 %362
    %366 = vset.pattern.permute.xlu0 0
    %367 = vperm.xlu0 %366, %v351
    %v368 = vpop.permute.xlu0 %367
    %371 = vset.pattern.permute.xlu0 0
    %372 = vperm.xlu0 %371, %v352
    %v373 = vpop.permute.xlu0 %372
    %376 = vset.pattern.permute.xlu0 0
    %377 = vperm.xlu0 %376, %v353
    %v378 = vpop.permute.xlu0 %377
    %381 = vset.pattern.permute.xlu0 0
    %382 = vperm.xlu0 %381, %v354
    %v383 = vpop.permute.xlu0 %382
    %v386 = vsel %vm151, %v343, 0
    %v389 = vsel %vm151, %v344, 0
    %v392 = vsel %vm151, %v345, 0
    %v395 = vsel %vm151, %v346, 0
    %v398 = vsel %vm151, %v347, 0
    %v401 = vsel %vm151, %v348, 0
    %403 = vmatprep.subr.mxu0 0.0
    %404 = vmatpush1.msra.mxu0 %v329
    %405 = vmatprep.subr.mxu0 0.0
    %406 = vmatpush1.msra.mxu0 %v330
    %407 = vmatprep.subr.mxu0 0.0
    %408 = vmatpush1.msra.mxu0 %v331
    %409 = vmatprep.subr.mxu0 0.0
    %410 = vmatpush1.msra.mxu0 %v332
    %411 = vmatprep.subr.mxu0 0.0
    %412 = vmatpush1.msra.mxu0 %v333
    %413 = vmatprep.subr.mxu0 0.0
    %414 = vmatpush1.msra.mxu0 %v334
    %415 = vmatprep.subr.mxu0 0.0
    %416 = vmatpush1.msra.mxu0 %v335
    %417 = vmatprep.subr.mxu0 0.0
    %418 = vmatpush1.msra.mxu0 %v336
    %419 = vmatprep.subr.mxu0 0.0
    %420 = vmatpush1.msra.mxu0 %v337
    %421 = vmatprep.subr.mxu0 0.0
    %422 = vmatpush1.msra.mxu0 %v338
    %423 = vmatprep.subr.mxu0 0.0
    %424 = vmatpush1.msra.mxu0 %v339
    %425 = vmatprep.subr.mxu0 0.0
    %426 = vmatpush1.msra.mxu0 %v340
    %427 = vmatprep.subr.mxu0 0.0
    %428 = vmatpush1.msra.mxu0 %v341
    %429 = vmatprep.subr.mxu0 0.0
    %430 = vmatpush1.msra.mxu0 %v342
    %431 = vmatprep.subr.mxu0 0.0
    %432 = vmatpush1.msra.mxu0 0.0
    %433 = vmatprep.subr.mxu0 0.0
    %434 = vmatpush1.msra.mxu0 0.0
    %435 = vmatprep.subr.mxu0 0.0
    %436 = vmatpush1.msra.mxu0 0.0
    %437 = vmatprep.subr.mxu0 0.0
    %438 = vmatpush1.msra.mxu0 0.0
    %439 = vmatprep.subr.mxu0 0.0
    %440 = vmatpush1.msra.mxu0 0.0
    %441 = vmatprep.subr.mxu0 0.0
    %442 = vmatpush1.msra.mxu0 0.0
    %443 = vmatprep.subr.mxu0 0.0
    %444 = vmatpush1.msra.mxu0 0.0
    %445 = vmatprep.subr.mxu0 0.0
    %446 = vmatpush1.msra.mxu0 0.0
    %447 = vmatprep.subr.mxu0 0.0
    %448 = vmatpush1.msra.mxu0 0.0
    %449 = vmatprep.subr.mxu0 0.0
    %450 = vmatpush1.msra.mxu0 0.0
    %451 = vmatprep.subr.mxu0 0.0
    %452 = vmatpush1.msra.mxu0 0.0
    %453 = vmatprep.subr.mxu0 0.0
    %454 = vmatpush1.msra.mxu0 0.0
    %455 = vmatprep.subr.mxu0 0.0
    %456 = vmatpush1.msra.mxu0 0.0
    %457 = vmatprep.subr.mxu0 0.0
    %458 = vmatpush1.msra.mxu0 0.0
    %459 = vmatprep.subr.mxu0 0.0
    %460 = vmatpush1.msra.mxu0 0.0
    %461 = vmatprep.subr.mxu0 0.0
    %462 = vmatpush1.msra.mxu0 0.0
    %463 = vmatprep.subr.mxu0 0.0
    %464 = vmatpush1.msra.mxu0 0.0
    %465 = vmatprep.subr.mxu0 0.0
    %466 = vmatpush1.msra.mxu0 0.0
    %467 = vmatprep.mubr.f32.mxu0 0.0
    %468 = vmatmul.mubr.f32.gmra.mrb[0].mxu0 %v386
    %v469 = vpop.f32.mrb[0].mxu0
    %v470 = vadd.f32 %v358, %v469
    %v471 = vpop.f32.mrb[0].mxu0
    %472 = vmatprep.mubr.f32.mxu0 0.0
    %473 = vmatmul.mubr.f32.gmra.mrb[0].mxu0 %v389
    %v474 = vpop.f32.mrb[0].mxu0
    %v475 = vadd.f32 %v363, %v474
    %v476 = vpop.f32.mrb[0].mxu0
    %477 = vmatprep.mubr.f32.mxu0 0.0
    %478 = vmatmul.mubr.f32.gmra.mrb[0].mxu0 %v392
    %v479 = vpop.f32.mrb[0].mxu0
    %v480 = vadd.f32 %v368, %v479
    %v481 = vpop.f32.mrb[0].mxu0
    %482 = vmatprep.mubr.f32.mxu0 0.0
    %483 = vmatmul.mubr.f32.gmra.mrb[0].mxu0 %v395
    %v484 = vpop.f32.mrb[0].mxu0
    %v485 = vadd.f32 %v373, %v484
    %v486 = vpop.f32.mrb[0].mxu0
    %487 = vmatprep.mubr.f32.mxu0 0.0
    %488 = vmatmul.mubr.f32.gmra.mrb[0].mxu0 %v398
    %v489 = vpop.f32.mrb[0].mxu0
    %v490 = vadd.f32 %v378, %v489
    %v491 = vpop.f32.mrb[0].mxu0
    %492 = vmatprep.mubr.f32.mxu0 0.0
    %493 = vmatmul.mubr.f32.gmra.mrb[0].mxu0 %v401
    %v494 = vpop.f32.mrb[0].mxu0
    %v495 = vadd.f32 %v383, %v494
    %v496 = vpop.f32.mrb[0].mxu0
    %497 = vdwg.mxu0
    %v498 = vmax.f32 %v470, 0.0
    %v499 = vmax.f32 %v475, 0.0
    %v500 = vmax.f32 %v480, 0.0
    %v501 = vmax.f32 %v485, 0.0
    %v502 = vmax.f32 %v490, 0.0
    %v503 = vmax.f32 %v495, 0.0
    %v504 = vld [vmem:[%s5] sm:$0xff]
    %v505 = vld [vmem:[%s5 + $0x8] sm:$0xff]
    %v506 = vld [vmem:[%s5 + $0x10] sm:$0xff]
    %v507 = vld [vmem:[%s5 + $0x18] sm:$0xff]
    %v508 = vld [vmem:[%s6] sm:$0xff]
    %v509 = vld [vmem:[%s6 + $0x8] sm:$0xff]
    %v510 = vld [vmem:[%s6 + $0x10] sm:$0xff]
    %v511 = vld [vmem:[%s6 + $0x18] sm:$0xff]
    %513 = vset.pattern.permute.xlu0 0
    %514 = vperm.xlu0 %513, %v508
    %v515 = vpop.permute.xlu0 %514
    %518 = vset.pattern.permute.xlu0 0
    %519 = vperm.xlu0 %518, %v509
    %v520 = vpop.permute.xlu0 %519
    %523 = vset.pattern.permute.xlu0 0
    %524 = vperm.xlu0 %523, %v510
    %v525 = vpop.permute.xlu0 %524
    %528 = vset.pattern.permute.xlu0 0
    %529 = vperm.xlu0 %528, %v511
    %v530 = vpop.permute.xlu0 %529
    %vm532 = vcmask 392192
    %v534 = vsel %vm532, %v504, 0
    %v537 = vsel %vm532, %v505, 0
    %v540 = vsel %vm532, %v506, 0
    %v543 = vsel %vm532, %v507, 0
    %545 = vmatprep.subr.mxu0 0.0
    %546 = vmatpush1.msra.mxu0 %v498
    %547 = vmatprep.subr.mxu0 0.0
    %548 = vmatpush1.msra.mxu0 %v499
    %549 = vmatprep.subr.mxu0 0.0
    %550 = vmatpush1.msra.mxu0 %v500
    %551 = vmatprep.subr.mxu0 0.0
    %552 = vmatpush1.msra.mxu0 %v501
    %553 = vmatprep.subr.mxu0 0.0
    %554 = vmatpush1.msra.mxu0 %v502
    %555 = vmatprep.subr.mxu0 0.0
    %556 = vmatpush1.msra.mxu0 %v503
    %557 = vmatprep.subr.mxu0 0.0
    %558 = vmatpush1.msra.mxu0 0.0
    %559 = vmatprep.subr.mxu0 0.0
    %560 = vmatpush1.msra.mxu0 0.0
    %561 = vmatprep.subr.mxu0 0.0
    %562 = vmatpush1.msra.mxu0 0.0
    %563 = vmatprep.subr.mxu0 0.0
    %564 = vmatpush1.msra.mxu0 0.0
    %565 = vmatprep.subr.mxu0 0.0
    %566 = vmatpush1.msra.mxu0 0.0
    %567 = vmatprep.subr.mxu0 0.0
    %568 = vmatpush1.msra.mxu0 0.0
    %569 = vmatprep.subr.mxu0 0.0
    %570 = vmatpush1.msra.mxu0 0.0
    %571 = vmatprep.subr.mxu0 0.0
    %572 = vmatpush1.msra.mxu0 0.0
    %573 = vmatprep.subr.mxu0 0.0
    %574 = vmatpush1.msra.mxu0 0.0
    %575 = vmatprep.subr.mxu0 0.0
    %576 = vmatpush1.msra.mxu0 0.0
    %577 = vmatprep.subr.mxu0 0.0
    %578 = vmatpush1.msra.mxu0 0.0
    %579 = vmatprep.subr.mxu0 0.0
    %580 = vmatpush1.msra.mxu0 0.0
    %581 = vmatprep.subr.mxu0 0.0
    %582 = vmatpush1.msra.mxu0 0.0
    %583 = vmatprep.subr.mxu0 0.0
    %584 = vmatpush1.msra.mxu0 0.0
    %585 = vmatprep.subr.mxu0 0.0
    %586 = vmatpush1.msra.mxu0 0.0
    %587 = vmatprep.subr.mxu0 0.0
    %588 = vmatpush1.msra.mxu0 0.0
    %589 = vmatprep.subr.mxu0 0.0
    %590 = vmatpush1.msra.mxu0 0.0
    %591 = vmatprep.subr.mxu0 0.0
    %592 = vmatpush1.msra.mxu0 0.0
    %593 = vmatprep.subr.mxu0 0.0
    %594 = vmatpush1.msra.mxu0 0.0
    %595 = vmatprep.subr.mxu0 0.0
    %596 = vmatpush1.msra.mxu0 0.0
    %597 = vmatprep.subr.mxu0 0.0
    %598 = vmatpush1.msra.mxu0 0.0
    %599 = vmatprep.subr.mxu0 0.0
    %600 = vmatpush1.msra.mxu0 0.0
    %601 = vmatprep.subr.mxu0 0.0
    %602 = vmatpush1.msra.mxu0 0.0
    %603 = vmatprep.subr.mxu0 0.0
    %604 = vmatpush1.msra.mxu0 0.0
    %605 = vmatprep.subr.mxu0 0.0
    %606 = vmatpush1.msra.mxu0 0.0
    %607 = vmatprep.subr.mxu0 0.0
    %608 = vmatpush1.msra.mxu0 0.0
    %609 = vmatprep.mubr.f32.mxu0 0.0
    %610 = vmatmul.mubr.f32.gmra.mrb[0].mxu0 %v534
    %v611 = vpop.f32.mrb[0].mxu0
    %v612 = vadd.f32 %v515, %v611
    %v613 = vpop.f32.mrb[0].mxu0
    %614 = vmatprep.mubr.f32.mxu0 0.0
    %615 = vmatmul.mubr.f32.gmra.mrb[0].mxu0 %v537
    %v616 = vpop.f32.mrb[0].mxu0
    %v617 = vadd.f32 %v520, %v616
    %v618 = vpop.f32.mrb[0].mxu0
    %619 = vmatprep.mubr.f32.mxu0 0.0
    %620 = vmatmul.mubr.f32.gmra.mrb[0].mxu0 %v540
    %v621 = vpop.f32.mrb[0].mxu0
    %v622 = vadd.f32 %v525, %v621
    %v623 = vpop.f32.mrb[0].mxu0
    %624 = vmatprep.mubr.f32.mxu0 0.0
    %625 = vmatmul.mubr.f32.gmra.mrb[0].mxu0 %v543
    %v626 = vpop.f32.mrb[0].mxu0
    %v627 = vadd.f32 %v530, %v626
    %v628 = vpop.f32.mrb[0].mxu0
    %629 = vdwg.mxu0
    %v630 = vmax.f32 %v612, 0.0
    %v631 = vmax.f32 %v617, 0.0
    %v632 = vmax.f32 %v622, 0.0
    %v633 = vmax.f32 %v627, 0.0
    %v634 = vld [vmem:[%s7] sm:$0xff]
    %v635 = vld [vmem:[%s7 + $0x8] sm:$0xff]
    %v636 = vld [vmem:[%s7 + $0x10] sm:$0xff]
    %v637 = vld [vmem:[%s7 + $0x18] sm:$0xff]
    %v638 = vld [vmem:[%s7 + $0x20] sm:$0xff]
    %v639 = vld [vmem:[%s7 + $0x28] sm:$0xff]
    %v640 = vld [vmem:[%s8] sm:$0xff]
    %v641 = vld [vmem:[%s8 + $0x8] sm:$0xff]
    %v642 = vld [vmem:[%s8 + $0x10] sm:$0xff]
    %v643 = vld [vmem:[%s8 + $0x18] sm:$0xff]
    %v644 = vld [vmem:[%s8 + $0x20] sm:$0xff]
    %v645 = vld [vmem:[%s8 + $0x28] sm:$0xff]
    %647 = vset.pattern.permute.xlu0 0
    %648 = vperm.xlu0 %647, %v640
    %v649 = vpop.permute.xlu0 %648
    %652 = vset.pattern.permute.xlu0 0
    %653 = vperm.xlu0 %652, %v641
    %v654 = vpop.permute.xlu0 %653
    %657 = vset.pattern.permute.xlu0 0
    %658 = vperm.xlu0 %657, %v642
    %v659 = vpop.permute.xlu0 %658
    %662 = vset.pattern.permute.xlu0 0
    %663 = vperm.xlu0 %662, %v643
    %v664 = vpop.permute.xlu0 %663
    %667 = vset.pattern.permute.xlu0 0
    %668 = vperm.xlu0 %667, %v644
    %v669 = vpop.permute.xlu0 %668
    %672 = vset.pattern.permute.xlu0 0
    %673 = vperm.xlu0 %672, %v645
    %v674 = vpop.permute.xlu0 %673
    %vm676 = vcmask 654336
    %v678 = vsel %vm676, %v634, 0
    %v681 = vsel %vm676, %v635, 0
    %v684 = vsel %vm676, %v636, 0
    %v687 = vsel %vm676, %v637, 0
    %v690 = vsel %vm676, %v638, 0
    %v693 = vsel %vm676, %v639, 0
    %695 = vmatprep.subr.mxu0 0.0
    %696 = vmatpush1.msra.mxu0 %v498
    %697 = vmatprep.subr.mxu0 0.0
    %698 = vmatpush1.msra.mxu0 %v499
    %699 = vmatprep.subr.mxu0 0.0
    %700 = vmatpush1.msra.mxu0 %v500
    %701 = vmatprep.subr.mxu0 0.0
    %702 = vmatpush1.msra.mxu0 %v501
    %703 = vmatprep.subr.mxu0 0.0
    %704 = vmatpush1.msra.mxu0 %v502
    %705 = vmatprep.subr.mxu0 0.0
    %706 = vmatpush1.msra.mxu0 %v503
    %707 = vmatprep.subr.mxu0 0.0
    %708 = vmatpush1.msra.mxu0 %v630
    %709 = vmatprep.subr.mxu0 0.0
    %710 = vmatpush1.msra.mxu0 %v631
    %711 = vmatprep.subr.mxu0 0.0
    %712 = vmatpush1.msra.mxu0 %v632
    %713 = vmatprep.subr.mxu0 0.0
    %714 = vmatpush1.msra.mxu0 %v633
    %715 = vmatprep.subr.mxu0 0.0
    %716 = vmatpush1.msra.mxu0 0.0
    %717 = vmatprep.subr.mxu0 0.0
    %718 = vmatpush1.msra.mxu0 0.0
    %719 = vmatprep.subr.mxu0 0.0
    %720 = vmatpush1.msra.mxu0 0.0
    %721 = vmatprep.subr.mxu0 0.0
    %722 = vmatpush1.msra.mxu0 0.0
    %723 = vmatprep.subr.mxu0 0.0
    %724 = vmatpush1.msra.mxu0 0.0
    %725 = vmatprep.subr.mxu0 0.0
    %726 = vmatpush1.msra.mxu0 0.0
    %727 = vmatprep.subr.mxu0 0.0
    %728 = vmatpush1.msra.mxu0 0.0
    %729 = vmatprep.subr.mxu0 0.0
    %730 = vmatpush1.msra.mxu0 0.0
    %731 = vmatprep.subr.mxu0 0.0
    %732 = vmatpush1.msra.mxu0 0.0
    %733 = vmatprep.subr.mxu0 0.0
    %734 = vmatpush1.msra.mxu0 0.0
    %735 = vmatprep.subr.mxu0 0.0
    %736 = vmatpush1.msra.mxu0 0.0
    %737 = vmatprep.subr.mxu0 0.0
    %738 = vmatpush1.msra.mxu0 0.0
    %739 = vmatprep.subr.mxu0 0.0
    %740 = vmatpush1.msra.mxu0 0.0
    %741 = vmatprep.subr.mxu0 0.0
    %742 = vmatpush1.msra.mxu0 0.0
    %743 = vmatprep.subr.mxu0 0.0
    %744 = vmatpush1.msra.mxu0 0.0
    %745 = vmatprep.subr.mxu0 0.0
    %746 = vmatpush1.msra.mxu0 0.0
    %747 = vmatprep.subr.mxu0 0.0
    %748 = vmatpush1.msra.mxu0 0.0
    %749 = vmatprep.subr.mxu0 0.0
    %750 = vmatpush1.msra.mxu0 0.0
    %751 = vmatprep.subr.mxu0 0.0
    %752 = vmatpush1.msra.mxu0 0.0
    %753 = vmatprep.subr.mxu0 0.0
    %754 = vmatpush1.msra.mxu0 0.0
    %755 = vmatprep.subr.mxu0 0.0
    %756 = vmatpush1.msra.mxu0 0.0
    %757 = vmatprep.subr.mxu0 0.0
    %758 = vmatpush1.msra.mxu0 0.0
    %759 = vmatprep.mubr.f32.mxu0 0.0
    %760 = vmatmul.mubr.f32.gmra.mrb[0].mxu0 %v678
    %v761 = vpop.f32.mrb[0].mxu0
    %v762 = vadd.f32 %v649, %v761
    %v763 = vpop.f32.mrb[0].mxu0
    %764 = vmatprep.mubr.f32.mxu0 0.0
    %765 = vmatmul.mubr.f32.gmra.mrb[0].mxu0 %v681
    %v766 = vpop.f32.mrb[0].mxu0
    %v767 = vadd.f32 %v654, %v766
    %v768 = vpop.f32.mrb[0].mxu0
    %769 = vmatprep.mubr.f32.mxu0 0.0
    %770 = vmatmul.mubr.f32.gmra.mrb[0].mxu0 %v684
    %v771 = vpop.f32.mrb[0].mxu0
    %v772 = vadd.f32 %v659, %v771
    %v773 = vpop.f32.mrb[0].mxu0
    %774 = vmatprep.mubr.f32.mxu0 0.0
    %775 = vmatmul.mubr.f32.gmra.mrb[0].mxu0 %v687
    %v776 = vpop.f32.mrb[0].mxu0
    %v777 = vadd.f32 %v664, %v776
    %v778 = vpop.f32.mrb[0].mxu0
    %779 = vmatprep.mubr.f32.mxu0 0.0
    %780 = vmatmul.mubr.f32.gmra.mrb[0].mxu0 %v690
    %v781 = vpop.f32.mrb[0].mxu0
    %v782 = vadd.f32 %v669, %v781
    %v783 = vpop.f32.mrb[0].mxu0
    %784 = vmatprep.mubr.f32.mxu0 0.0
    %785 = vmatmul.mubr.f32.gmra.mrb[0].mxu0 %v693
    %v786 = vpop.f32.mrb[0].mxu0
    %v787 = vadd.f32 %v674, %v786
    %v788 = vpop.f32.mrb[0].mxu0
    %789 = vdwg.mxu0
    %v790 = vmax.f32 %v762, 0.0
    %v791 = vmax.f32 %v767, 0.0
    %v792 = vmax.f32 %v772, 0.0
    %v793 = vmax.f32 %v777, 0.0
    %v794 = vmax.f32 %v782, 0.0
    %v795 = vmax.f32 %v787, 0.0
    %v796 = vld [vmem:[%s9] sm:$0xff]
    %v797 = vld [vmem:[%s9 + $0x8] sm:$0xff]
    %v798 = vld [vmem:[%s9 + $0x10] sm:$0xff]
    %v799 = vld [vmem:[%s9 + $0x18] sm:$0xff]
    %v800 = vld [vmem:[%s9 + $0x20] sm:$0xff]
    %v801 = vld [vmem:[%s9 + $0x28] sm:$0xff]
    %v802 = vld [vmem:[%s9 + $0x30] sm:$0xff]
    %v803 = vld [vmem:[%s9 + $0x38] sm:$0xff]
    %v804 = vld [vmem:[%s9 + $0x40] sm:$0xff]
    %v805 = vld [vmem:[%s9 + $0x48] sm:$0xff]
    %v806 = vld [vmem:[%s9 + $0x50] sm:$0xff]
    %v807 = vld [vmem:[%s9 + $0x58] sm:$0xff]
    %v808 = vld [vmem:[%s9 + $0x60] sm:$0xff]
    %v809 = vld [vmem:[%s9 + $0x68] sm:$0xff]
    %v810 = vld [vmem:[%s9 + $0x70] sm:$0xff]
    %v811 = vld [vmem:[%s9 + $0x78] sm:$0xff]
    %v812 = vld [vmem:[%s9 + $0x80] sm:$0xff]
    %v813 = vld [vmem:[%s9 + $0x88] sm:$0xff]
    %v814 = vld [vmem:[%s9 + $0x90] sm:$0xff]
    %v815 = vld [vmem:[%s9 + $0x98] sm:$0xff]
    %v816 = vld [vmem:[%s9 + $0xa0] sm:$0xff]
    %v817 = vld [vmem:[%s9 + $0xa8] sm:$0xff]
    %v818 = vld [vmem:[%s9 + $0xb0] sm:$0xff]
    %v819 = vld [vmem:[%s9 + $0xb8] sm:$0xff]
    %v820 = vld [vmem:[%s9 + $0xc0] sm:$0xff]
    %v821 = vld [vmem:[%s9 + $0xc8] sm:$0xff]
    %v822 = vld [vmem:[%s9 + $0xd0] sm:$0xff]
    %v823 = vld [vmem:[%s9 + $0xd8] sm:$0xff]
    %v824 = vld [vmem:[%s10] sm:$0xff]
    %v825 = vld [vmem:[%s10 + $0x8] sm:$0xff]
    %v826 = vld [vmem:[%s10 + $0x10] sm:$0xff]
    %v827 = vld [vmem:[%s10 + $0x18] sm:$0xff]
    %v828 = vld [vmem:[%s10 + $0x20] sm:$0xff]
    %v829 = vld [vmem:[%s10 + $0x28] sm:$0xff]
    %v830 = vld [vmem:[%s10 + $0x30] sm:$0xff]
    %v831 = vld [vmem:[%s10 + $0x38] sm:$0xff]
    %v832 = vld [vmem:[%s10 + $0x40] sm:$0xff]
    %v833 = vld [vmem:[%s10 + $0x48] sm:$0xff]
    %v834 = vld [vmem:[%s10 + $0x50] sm:$0xff]
    %v835 = vld [vmem:[%s10 + $0x58] sm:$0xff]
    %v836 = vld [vmem:[%s10 + $0x60] sm:$0xff]
    %v837 = vld [vmem:[%s10 + $0x68] sm:$0xff]
    %839 = vset.pattern.permute.xlu0 0
    %840 = vperm.xlu0 %839, %v824
    %v841 = vpop.permute.xlu0 %840
    %844 = vset.pattern.permute.xlu0 0
    %845 = vperm.xlu0 %844, %v825
    %v846 = vpop.permute.xlu0 %845
    %849 = vset.pattern.permute.xlu0 0
    %850 = vperm.xlu0 %849, %v826
    %v851 = vpop.permute.xlu0 %850
    %854 = vset.pattern.permute.xlu0 0
    %855 = vperm.xlu0 %854, %v827
    %v856 = vpop.permute.xlu0 %855
    %859 = vset.pattern.permute.xlu0 0
    %860 = vperm.xlu0 %859, %v828
    %v861 = vpop.permute.xlu0 %860
    %864 = vset.pattern.permute.xlu0 0
    %865 = vperm.xlu0 %864, %v829
    %v866 = vpop.permute.xlu0 %865
    %869 = vset.pattern.permute.xlu0 0
    %870 = vperm.xlu0 %869, %v830
    %v871 = vpop.permute.xlu0 %870
    %874 = vset.pattern.permute.xlu0 0
    %875 = vperm.xlu0 %874, %v831
    %v876 = vpop.permute.xlu0 %875
    %879 = vset.pattern.permute.xlu0 0
    %880 = vperm.xlu0 %879, %v832
    %v881 = vpop.permute.xlu0 %880
    %884 = vset.pattern.permute.xlu0 0
    %885 = vperm.xlu0 %884, %v833
    %v886 = vpop.permute.xlu0 %885
    %889 = vset.pattern.permute.xlu0 0
    %890 = vperm.xlu0 %889, %v834
    %v891 = vpop.permute.xlu0 %890
    %894 = vset.pattern.permute.xlu0 0
    %895 = vperm.xlu0 %894, %v835
    %v896 = vpop.permute.xlu0 %895
    %899 = vset.pattern.permute.xlu0 0
    %900 = vperm.xlu0 %899, %v836
    %v901 = vpop.permute.xlu0 %900
    %904 = vset.pattern.permute.xlu0 0
    %905 = vperm.xlu0 %904, %v837
    %v906 = vpop.permute.xlu0 %905
    %vm908 = vcmask 261120
    %v910 = vsel %vm908, %v797, 0
    %v913 = vsel %vm908, %v799, 0
    %v916 = vsel %vm908, %v801, 0
    %v919 = vsel %vm908, %v803, 0
    %v922 = vsel %vm908, %v805, 0
    %v925 = vsel %vm908, %v807, 0
    %v928 = vsel %vm908, %v809, 0
    %v931 = vsel %vm908, %v811, 0
    %v934 = vsel %vm908, %v813, 0
    %v937 = vsel %vm908, %v815, 0
    %v940 = vsel %vm908, %v817, 0
    %v943 = vsel %vm908, %v819, 0
    %v946 = vsel %vm908, %v821, 0
    %v949 = vsel %vm908, %v823, 0
    %951 = vmatprep.subr.mxu0 0.0
    %952 = vmatpush1.msra.mxu0 %v329
    %953 = vmatprep.subr.mxu0 0.0
    %954 = vmatpush1.msra.mxu0 %v330
    %955 = vmatprep.subr.mxu0 0.0
    %956 = vmatpush1.msra.mxu0 %v331
    %957 = vmatprep.subr.mxu0 0.0
    %958 = vmatpush1.msra.mxu0 %v332
    %959 = vmatprep.subr.mxu0 0.0
    %960 = vmatpush1.msra.mxu0 %v333
    %961 = vmatprep.subr.mxu0 0.0
    %962 = vmatpush1.msra.mxu0 %v334
    %963 = vmatprep.subr.mxu0 0.0
    %964 = vmatpush1.msra.mxu0 %v335
    %965 = vmatprep.subr.mxu0 0.0
    %966 = vmatpush1.msra.mxu0 %v336
    %967 = vmatprep.subr.mxu0 0.0
    %968 = vmatpush1.msra.mxu0 %v337
    %969 = vmatprep.subr.mxu0 0.0
    %970 = vmatpush1.msra.mxu0 %v338
    %971 = vmatprep.subr.mxu0 0.0
    %972 = vmatpush1.msra.mxu0 %v339
    %973 = vmatprep.subr.mxu0 0.0
    %974 = vmatpush1.msra.mxu0 %v340
    %975 = vmatprep.subr.mxu0 0.0
    %976 = vmatpush1.msra.mxu0 %v341
    %977 = vmatprep.subr.mxu0 0.0
    %978 = vmatpush1.msra.mxu0 %v342
    %979 = vmatprep.subr.mxu0 0.0
    %980 = vmatpush1.msra.mxu0 %v790
    %981 = vmatprep.subr.mxu0 0.0
    %982 = vmatpush1.msra.mxu0 %v791
    %983 = vmatprep.subr.mxu0 0.0
    %984 = vmatpush1.msra.mxu0 %v792
    %985 = vmatprep.subr.mxu0 0.0
    %986 = vmatpush1.msra.mxu0 %v793
    %987 = vmatprep.subr.mxu0 0.0
    %988 = vmatpush1.msra.mxu0 %v794
    %989 = vmatprep.subr.mxu0 0.0
    %990 = vmatpush1.msra.mxu0 %v795
    %991 = vmatprep.subr.mxu0 0.0
    %992 = vmatpush1.msra.mxu0 0.0
    %993 = vmatprep.subr.mxu0 0.0
    %994 = vmatpush1.msra.mxu0 0.0
    %995 = vmatprep.subr.mxu0 0.0
    %996 = vmatpush1.msra.mxu0 0.0
    %997 = vmatprep.subr.mxu0 0.0
    %998 = vmatpush1.msra.mxu0 0.0
    %999 = vmatprep.subr.mxu0 0.0
    %1000 = vmatpush1.msra.mxu0 0.0
    %1001 = vmatprep.subr.mxu0 0.0
    %1002 = vmatpush1.msra.mxu0 0.0
    %1003 = vmatprep.subr.mxu0 0.0
    %1004 = vmatpush1.msra.mxu0 0.0
    %1005 = vmatprep.subr.mxu0 0.0
    %1006 = vmatpush1.msra.mxu0 0.0
    %1007 = vmatprep.subr.mxu0 0.0
    %1008 = vmatpush1.msra.mxu0 0.0
    %1009 = vmatprep.subr.mxu0 0.0
    %1010 = vmatpush1.msra.mxu0 0.0
    %1011 = vmatprep.subr.mxu0 0.0
    %1012 = vmatpush1.msra.mxu0 0.0
    %1013 = vmatprep.subr.mxu0 0.0
    %1014 = vmatpush1.msra.mxu0 0.0
    %1015 = vmatprep.mubr.f32.mxu0 %v910
    %1016 = vmatmul.mubr.f32.gmra.mrb[0].mxu0 %v796
    %v1017 = vpop.f32.mrb[0].mxu0
    %v1018 = vadd.f32 %v841, %v1017
    %v1019 = vpop.f32.mrb[0].mxu0
    %1020 = vmatprep.mubr.f32.mxu0 %v913
    %1021 = vmatmul.mubr.f32.gmra.mrb[0].mxu0 %v798
    %v1022 = vpop.f32.mrb[0].mxu0
    %v1023 = vadd.f32 %v846, %v1022
    %v1024 = vpop.f32.mrb[0].mxu0
    %1025 = vmatprep.mubr.f32.mxu0 %v916
    %1026 = vmatmul.mubr.f32.gmra.mrb[0].mxu0 %v800
    %v1027 = vpop.f32.mrb[0].mxu0
    %v1028 = vadd.f32 %v851, %v1027
    %v1029 = vpop.f32.mrb[0].mxu0
    %1030 = vmatprep.mubr.f32.mxu0 %v919
    %1031 = vmatmul.mubr.f32.gmra.mrb[0].mxu0 %v802
    %v1032 = vpop.f32.mrb[0].mxu0
    %v1033 = vadd.f32 %v856, %v1032
    %v1034 = vpop.f32.mrb[0].mxu0
    %1035 = vmatprep.mubr.f32.mxu0 %v922
    %1036 = vmatmul.mubr.f32.gmra.mrb[0].mxu0 %v804
    %v1037 = vpop.f32.mrb[0].mxu0
    %v1038 = vadd.f32 %v861, %v1037
    %v1039 = vpop.f32.mrb[0].mxu0
    %1040 = vmatprep.mubr.f32.mxu0 %v925
    %1041 = vmatmul.mubr.f32.gmra.mrb[0].mxu0 %v806
    %v1042 = vpop.f32.mrb[0].mxu0
    %v1043 = vadd.f32 %v866, %v1042
    %v1044 = vpop.f32.mrb[0].mxu0
    %1045 = vmatprep.mubr.f32.mxu0 %v928
    %1046 = vmatmul.mubr.f32.gmra.mrb[0].mxu0 %v808
    %v1047 = vpop.f32.mrb[0].mxu0
    %v1048 = vadd.f32 %v871, %v1047
    %v1049 = vpop.f32.mrb[0].mxu0
    %1050 = vmatprep.mubr.f32.mxu0 %v931
    %1051 = vmatmul.mubr.f32.gmra.mrb[0].mxu0 %v810
    %v1052 = vpop.f32.mrb[0].mxu0
    %v1053 = vadd.f32 %v876, %v1052
    %v1054 = vpop.f32.mrb[0].mxu0
    %1055 = vmatprep.mubr.f32.mxu0 %v934
    %1056 = vmatmul.mubr.f32.gmra.mrb[0].mxu0 %v812
    %v1057 = vpop.f32.mrb[0].mxu0
    %v1058 = vadd.f32 %v881, %v1057
    %v1059 = vpop.f32.mrb[0].mxu0
    %1060 = vmatprep.mubr.f32.mxu0 %v937
    %1061 = vmatmul.mubr.f32.gmra.mrb[0].mxu0 %v814
    %v1062 = vpop.f32.mrb[0].mxu0
    %v1063 = vadd.f32 %v886, %v1062
    %v1064 = vpop.f32.mrb[0].mxu0
    %1065 = vmatprep.mubr.f32.mxu0 %v940
    %1066 = vmatmul.mubr.f32.gmra.mrb[0].mxu0 %v816
    %v1067 = vpop.f32.mrb[0].mxu0
    %v1068 = vadd.f32 %v891, %v1067
    %v1069 = vpop.f32.mrb[0].mxu0
    %1070 = vmatprep.mubr.f32.mxu0 %v943
    %1071 = vmatmul.mubr.f32.gmra.mrb[0].mxu0 %v818
    %v1072 = vpop.f32.mrb[0].mxu0
    %v1073 = vadd.f32 %v896, %v1072
    %v1074 = vpop.f32.mrb[0].mxu0
    %1075 = vmatprep.mubr.f32.mxu0 %v946
    %1076 = vmatmul.mubr.f32.gmra.mrb[0].mxu0 %v820
    %v1077 = vpop.f32.mrb[0].mxu0
    %v1078 = vadd.f32 %v901, %v1077
    %v1079 = vpop.f32.mrb[0].mxu0
    %1080 = vmatprep.mubr.f32.mxu0 %v949
    %1081 = vmatmul.mubr.f32.gmra.mrb[0].mxu0 %v822
    %v1082 = vpop.f32.mrb[0].mxu0
    %v1083 = vadd.f32 %v906, %v1082
    %v1084 = vpop.f32.mrb[0].mxu0
    %1085 = vdwg.mxu0
    %v1086 = vmax.f32 %v1018, 0.0
    %v1087 = vmax.f32 %v1023, 0.0
    %v1088 = vmax.f32 %v1028, 0.0
    %v1089 = vmax.f32 %v1033, 0.0
    %v1090 = vmax.f32 %v1038, 0.0
    %v1091 = vmax.f32 %v1043, 0.0
    %v1092 = vmax.f32 %v1048, 0.0
    %v1093 = vmax.f32 %v1053, 0.0
    %v1094 = vmax.f32 %v1058, 0.0
    %v1095 = vmax.f32 %v1063, 0.0
    %v1096 = vmax.f32 %v1068, 0.0
    %v1097 = vmax.f32 %v1073, 0.0
    %v1098 = vmax.f32 %v1078, 0.0
    %v1099 = vmax.f32 %v1083, 0.0
    %1100 = vst [vmem:[#allocation2] sm:$0xff] %v1086
    %1101 = vst [vmem:[#allocation2 + $0x8] sm:$0xff] %v1087
    %1102 = vst [vmem:[#allocation2 + $0x10] sm:$0xff] %v1088
    %1103 = vst [vmem:[#allocation2 + $0x18] sm:$0xff] %v1089
    %1104 = vst [vmem:[#allocation2 + $0x20] sm:$0xff] %v1090
    %1105 = vst [vmem:[#allocation2 + $0x28] sm:$0xff] %v1091
    %1106 = vst [vmem:[#allocation2 + $0x30] sm:$0xff] %v1092
    %1107 = vst [vmem:[#allocation2 + $0x38] sm:$0xff] %v1093
    %1108 = vst [vmem:[#allocation2 + $0x40] sm:$0xff] %v1094
    %1109 = vst [vmem:[#allocation2 + $0x48] sm:$0xff] %v1095
    %1110 = vst [vmem:[#allocation2 + $0x50] sm:$0xff] %v1096
    %1111 = vst [vmem:[#allocation2 + $0x58] sm:$0xff] %v1097
    %1112 = vst [vmem:[#allocation2 + $0x60] sm:$0xff] %v1098
    %1113 = vst [vmem:[#allocation2 + $0x68] sm:$0xff] %v1099
    // Predicated region
    $region46: #{tpu_custom_call.1} parent=1 // pred_check
      _
    $region47: #{tpu_custom_call.1} parent=1 // pred_check_branch
      %1115 = sbr.rel (0) target = $region49
    $region48: #{tpu_custom_call.1} parent=1 // pred_region
      %s1117 = ssub.s32 1792, 1792
      %1118 = vsyncadd [#allocation3], %s1117
      %s1119 = sshll.u32 [#allocation2], 4
      %s1120 = int_to_ptr.vmem [resolvable:$true] %s1119
      %1125 = dma.vmem_to_hbm [thread:$0]  %s1120, 1792, %s11, [#allocation3], 128, 128, 8
    $region49: #{tpu_custom_call.1} parent=1 // pred_fallthru
      _
    // Predicated region
    $region50: #{tpu_custom_call.1} parent=1 // pred_check
      _
    $region51: #{tpu_custom_call.1} parent=1 // pred_check_branch
      %1127 = sbr.rel (0) target = $region53
    $region52: #{tpu_custom_call.1} parent=1 // pred_region
      %1128 = dma.done [#allocation3], 1792
    $region53: #{tpu_custom_call.1} parent=1 // pred_fallthru
      _
    %1129 = vsyncpa [#allocation3], 1

</llo_original>
